<compile_context>
chip_gen: v6e
topology: v6e:2x2x1
jax: 0.10.0
libtpu: 0.0.40
codegen_flags: <defaults>
</compile_context>

<pallas_src>
import functools

import jax
import jax.numpy as jnp
import numpy as np
from jax.experimental import pallas as pl
from jax.experimental.pallas import tpu as pltpu

NODE_FEATURES = 4
OUTPUT_SIZE = 32
FILTER_SIZE = 2          # K = 2 -> only the k=0 and k=1 diffusion terms
N_NODES = 16

_KPACK = 4 * NODE_FEATURES          # [X | PfX | PbX | ones] -> 16 rows in packed W
_GATE_PAD = 128                     # each gate block padded to a full lane tile


def _dcrnn_kernel(x_ref, p_ref, w_ref, wl_ref, out_ref):
    X = x_ref[...]                                  # [N, Fin]
    Pf = p_ref[0]                                   # [N, N] forward random-walk
    Pb = p_ref[1]                                   # [N, N] backward random-walk
    W = w_ref[...]                                  # [16, 256] packed gate weights+bias
    WL = wl_ref[...]                                # [2, 128]  row0=wl, row1[0]=bl

    dot = functools.partial(jnp.dot, preferred_element_type=jnp.float32)

    # diffusion of the input features (H0 == 0, so only the X path survives)
    Xf = dot(Pf, X)                                 # [N, Fin]
    Xb = dot(Pb, X)                                 # [N, Fin]
    ones = jnp.ones((X.shape[0], NODE_FEATURES), jnp.float32)   # bias lane(s)
    Xcat = jnp.concatenate([X, Xf, Xb, ones], axis=-1)          # [N, 16]

    # one fused lane-dense MXU op -> Z and Htil pre-activations
    G = dot(Xcat, W)                                # [N, 256]
    Z = jax.nn.sigmoid(G[:, :_GATE_PAD])            # cols >=32 are sigmoid(0)=0.5
    Ht = jnp.tanh(G[:, _GATE_PAD:])                 # cols >=32 are tanh(0)=0

    # H' = (1-Z)*Ht  (H0 == 0), then relu; padded cols are exactly 0
    h = jnp.maximum((1.0 - Z) * Ht, 0.0)            # [N, 128]

    # Linear(32 -> 1) as VPU multiply + lane reduction (no 1-wide MXU column)
    out_ref[...] = (jnp.sum(h * WL[0:1, :], axis=-1, keepdims=True)
                    + WL[1:2, 0:1])                 # [N, 1]


def _diffusion_matrices(n, edge_index, edge_weight):
    """Graph normalization hoisted out of the kernel (static per graph)."""
    adj = jnp.zeros((n, n), jnp.float32).at[edge_index[0], edge_index[1]].add(
        edge_weight.astype(jnp.float32))
    # TODO(synk): torch_geometric_temporal's DConv pairs norms with edges re-emitted by
    # dense_to_sparse(A^T); we use the order-consistent dense form (same math).
    bm = (adj != 0.0).astype(jnp.float32)           # binary adjacency
    deg_out = adj.sum(1, keepdims=True)             # [N, 1] weighted out-degree
    deg_in = adj.sum(0, keepdims=True)              # [1, N] weighted in-degree
    inv_out = jnp.where(deg_out != 0.0, 1.0 / deg_out, 0.0)
    inv_in = jnp.where(deg_in != 0.0, 1.0 / deg_in, 0.0)
    p_fwd = bm.T * inv_out.T                        # row=dst, col=src, / deg_out[src]
    p_bwd = bm * inv_in.T                           # row j scaled by 1/deg_in[j]
    return jnp.stack([p_fwd, p_bwd])                # [2, N, N]


def _pack_weights(params):
    """Fuse Z/Htil gate weights + biases into one [16, 256] matrix, wl/bl into [2, 128]."""
    wx, bg, wl, bl = params["wx"], params["bg"], params["wl"], params["bl"]
    # wh is mathematically dead: the torch module never passes h_, so H0 == 0.
    hdim = OUTPUT_SIZE

    def gate_block(g):
        # rows: [X | P_fwd X | P_bwd X | bias]  (k=0 terms of both directions summed)
        return jnp.concatenate([wx[g, 0] + wx[g, 2], wx[g, 1], wx[g, 3], bg[g]], axis=0)

    W = jnp.zeros((_KPACK, 2 * _GATE_PAD), jnp.float32)
    W = W.at[:3 * NODE_FEATURES + 1, :hdim].set(gate_block(0))              # Z gate
    W = W.at[:3 * NODE_FEATURES + 1, _GATE_PAD:_GATE_PAD + hdim].set(gate_block(2))  # Htil

    WL = jnp.zeros((2, _GATE_PAD), jnp.float32)
    WL = WL.at[0, :hdim].set(wl[:, 0]).at[1, 0].set(bl[0, 0])
    return W, WL


def my_dcrnn_forward_batched(params, xs, edge_index, edge_weight):
    """xs: [T, N, Fin] -> [T, N, 1].  Grid over T, marked 'parallel' (2 TCs on v7x)."""
    t_steps, n, _ = xs.shape
    P = _diffusion_matrices(n, edge_index, edge_weight)
    W, WL = _pack_weights(params)

    return pl.pallas_call(
        _dcrnn_kernel,
        out_shape=jax.ShapeDtypeStruct((t_steps, n, 1), jnp.float32),
        grid=(t_steps,),
        in_specs=[
            pl.BlockSpec((None, n, NODE_FEATURES), lambda t: (t, 0, 0)),  # X per step
            pl.BlockSpec((2, n, n), lambda t: (0, 0, 0)),                 # P (shared)
            pl.BlockSpec((_KPACK, 2 * _GATE_PAD), lambda t: (0, 0)),      # W (shared)
            pl.BlockSpec((2, _GATE_PAD), lambda t: (0, 0)),               # wl/bl (shared)
        ],
        out_specs=pl.BlockSpec((None, n, 1), lambda t: (t, 0, 0)),
        compiler_params=pltpu.CompilerParams(
            dimension_semantics=("parallel",)),
    )(xs.astype(jnp.float32), P, W, WL)


def my_dcrnn_forward(params, x, edge_index, edge_weight, h_=None, c=None):
    """Mirrors MY_DCRNN_.forward(x, edge_index, edge_weight, h_, c)."""
    del h_, c  # the torch module ignores both
    out = my_dcrnn_forward_batched(params, x[None], edge_index, edge_weight)[0]
    return out, None, None


def _reference(params, x, edge_index, edge_weight):
    """Pure-JAX replica of the FULL original math (incl. the dead H-path / R gate)."""
    n = x.shape[0]
    adj = jnp.zeros((n, n), jnp.float32).at[edge_index[0], edge_index[1]].add(
        edge_weight)
    bm = (adj != 0.0).astype(jnp.float32)
    deg_out = adj.sum(1, keepdims=True)
    deg_in = adj.sum(0, keepdims=True)
    inv_out = jnp.where(deg_out != 0, 1.0 / deg_out, 0.0)
    inv_in = jnp.where(deg_in != 0, 1.0 / deg_in, 0.0)
    p_fwd = bm.T * inv_out.T
    p_bwd = bm * inv_in.T
    h0 = jnp.zeros((n, OUTPUT_SIZE), jnp.float32)
    wx, wh, bg = params["wx"], params["wh"], params["bg"]

    def dconv(g, xp, hp):
        return (xp @ (wx[g, 0] + wx[g, 2]) + hp @ (wh[g, 0] + wh[g, 2])
                + (p_fwd @ xp) @ wx[g, 1] + (p_fwd @ hp) @ wh[g, 1]
                + (p_bwd @ xp) @ wx[g, 3] + (p_bwd @ hp) @ wh[g, 3] + bg[g])

    z = jax.nn.sigmoid(dconv(0, x, h0))
    r = jax.nn.sigmoid(dconv(1, x, h0))
    ht = jnp.tanh(dconv(2, x, h0 * r))
    hn = z * h0 + (1 - z) * ht
    return jnp.maximum(hn, 0.0) @ params["wl"] + params["bl"]


def init_params(key):
    fc_x, fc_h = NODE_FEATURES, OUTPUT_SIZE
    k = jax.random.split(key, 5)
    return {
        # [gate(z,r,h), (dir,k) flat=4, in, out]
        "wx": 0.2 * jax.random.normal(k[0], (3, 4, fc_x, OUTPUT_SIZE), jnp.float32),
        "wh": 0.2 * jax.random.normal(k[1], (3, 4, fc_h, OUTPUT_SIZE), jnp.float32),
        "bg": 0.1 * jax.random.normal(k[2], (3, 1, OUTPUT_SIZE), jnp.float32),
        "wl": 0.2 * jax.random.normal(k[3], (OUTPUT_SIZE, 1), jnp.float32),
        "bl": 0.1 * jax.random.normal(k[4], (1, 1), jnp.float32),
    }


if __name__ == "__main__":
    key = jax.random.PRNGKey(0)
    k_x, k_w, k_p, k_t = jax.random.split(key, 4)

    x = jax.random.normal(k_x, (N_NODES, NODE_FEATURES), jnp.float32)
    # ring graph: i -> i+1 and i -> i+2 (every node has in/out degree 2)
    src = jnp.concatenate([jnp.arange(N_NODES), jnp.arange(N_NODES)])
    dst = jnp.concatenate([(jnp.arange(N_NODES) + 1) % N_NODES,
                           (jnp.arange(N_NODES) + 2) % N_NODES])
    edge_index = jnp.stack([src, dst]).astype(jnp.int32)      # [2, 32]
    edge_weight = 0.5 + jax.random.uniform(k_w, (edge_index.shape[1],),
                                           jnp.float32)       # [32]
    h_ = jnp.zeros((N_NODES, OUTPUT_SIZE), jnp.float32)        # unused, as in torch
    c = None                                                   # unused, as in torch

    params = init_params(k_p)

    # single-step forward (matches the torch module's signature)
    out, _, _ = my_dcrnn_forward(params, x, edge_index, edge_weight, h_, c)
    out = jax.block_until_ready(out)
    ref = _reference(params, x, edge_index, edge_weight)
    np.testing.assert_allclose(np.asarray(out), np.asarray(ref),
                               rtol=1e-5, atol=1e-5)
    assert out.shape == (N_NODES, 1)

    # batched-over-timesteps path (amortizes launch/DMA; 'parallel' axis -> 2 TCs on v7x)
    T = 8
    xs = jax.random.normal(k_t, (T, N_NODES, NODE_FEATURES), jnp.float32)
    outs = jax.block_until_ready(
        my_dcrnn_forward_batched(params, xs, edge_index, edge_weight))
    refs = jnp.stack([_reference(params, xs[t], edge_index, edge_weight)
                      for t in range(T)])
    np.testing.assert_allclose(np.asarray(outs), np.asarray(refs),
                               rtol=1e-5, atol=1e-5)

    print("KERNEL_OK")
</pallas_src>

<mosaic_0001>
module attributes {stable_mosaic.version = 11 : i64} {
  func.func @_dcrnn_kernel(%arg0: i32, %arg1: memref<1x16x4xf32, #tpu.memory_space<vmem>>, %arg2: memref<2x16x16xf32, #tpu.memory_space<vmem>>, %arg3: memref<16x256xf32, #tpu.memory_space<vmem>>, %arg4: memref<2x128xf32, #tpu.memory_space<vmem>>, %arg5: memref<1x16x1xf32, #tpu.memory_space<vmem>>) attributes {dimension_semantics = [#tpu.dimension_semantics<parallel>], iteration_bounds = array<i64: 1>, scalar_prefetch = 0 : i64, scratch_operands = 0 : i64, tpu.core_type = #tpu.core_type<tc>, window_params = [{transform_indices = @transform_0, window_bounds = array<i64: 1, 16, 4>}, {pipeline_mode = #tpu.pipeline_mode<synchronous>, transform_indices = @transform_1, window_bounds = array<i64: 2, 16, 16>}, {pipeline_mode = #tpu.pipeline_mode<synchronous>, transform_indices = @transform_2, window_bounds = array<i64: 16, 256>}, {pipeline_mode = #tpu.pipeline_mode<synchronous>, transform_indices = @transform_3, window_bounds = array<i64: 2, 128>}, {transform_indices = @transform_4, window_bounds = array<i64: 1, 16, 1>}]} {
    %c0 = arith.constant 0 : index
    %c0_0 = arith.constant 0 : index
    %c0_1 = arith.constant 0 : index
    %0 = vector.load %arg1[%c0, %c0_0, %c0_1] : memref<1x16x4xf32, #tpu.memory_space<vmem>>, vector<1x16x4xf32>
    %1 = vector.shape_cast %0 : vector<1x16x4xf32> to vector<16x4xf32>
    %c0_2 = arith.constant 0 : index
    %c0_3 = arith.constant 0 : index
    %c0_4 = arith.constant 0 : index
    %2 = vector.load %arg2[%c0_2, %c0_3, %c0_4] : memref<2x16x16xf32, #tpu.memory_space<vmem>>, vector<1x16x16xf32>
    %3 = vector.shape_cast %2 : vector<1x16x16xf32> to vector<16x16xf32>
    %c1 = arith.constant 1 : index
    %c0_5 = arith.constant 0 : index
    %c0_6 = arith.constant 0 : index
    %4 = vector.load %arg2[%c1, %c0_5, %c0_6] : memref<2x16x16xf32, #tpu.memory_space<vmem>>, vector<1x16x16xf32>
    %5 = vector.shape_cast %4 : vector<1x16x16xf32> to vector<16x16xf32>
    %c0_7 = arith.constant 0 : index
    %c0_8 = arith.constant 0 : index
    %6 = vector.load %arg3[%c0_7, %c0_8] : memref<16x256xf32, #tpu.memory_space<vmem>>, vector<16x256xf32>
    %c0_9 = arith.constant 0 : index
    %c0_10 = arith.constant 0 : index
    %7 = vector.load %arg4[%c0_9, %c0_10] : memref<2x128xf32, #tpu.memory_space<vmem>>, vector<2x128xf32>
    %cst = arith.constant dense<0.000000e+00> : vector<16x4xf32>
    %8 = tpu.matmul %3, %1, %cst {dimension_numbers = #tpu.dot_dimension_numbers<[1], [0], [0], [1], [0, 0, 1, 1], [], []>} : vector<16x16xf32>, vector<16x4xf32>, vector<16x4xf32> -> vector<16x4xf32>
    %cst_11 = arith.constant dense<0.000000e+00> : vector<16x4xf32>
    %9 = tpu.matmul %5, %1, %cst_11 {dimension_numbers = #tpu.dot_dimension_numbers<[1], [0], [0], [1], [0, 0, 1, 1], [], []>} : vector<16x16xf32>, vector<16x4xf32>, vector<16x4xf32> -> vector<16x4xf32>
    %cst_12 = arith.constant 1.000000e+00 : f32
    %10 = vector.broadcast %cst_12 : f32 to vector<16x4xf32>
    %11 = tpu.concatenate %1, %8, %9, %10 in 1 : vector<16x4xf32>, vector<16x4xf32>, vector<16x4xf32>, vector<16x4xf32> -> vector<16x16xf32>
    %cst_13 = arith.constant dense<0.000000e+00> : vector<16x256xf32>
    %12 = tpu.matmul %11, %6, %cst_13 {dimension_numbers = #tpu.dot_dimension_numbers<[1], [0], [0], [1], [0, 0, 1, 1], [], []>} : vector<16x16xf32>, vector<16x256xf32>, vector<16x256xf32> -> vector<16x256xf32>
    %13 = vector.extract_strided_slice %12 {offsets = [0, 0], sizes = [16, 128], strides = [1, 1]} : vector<16x256xf32> to vector<16x128xf32>
    %14 = arith.negf %13 : vector<16x128xf32>
    %15 = math.exp %14 : vector<16x128xf32>
    %cst_14 = arith.constant 1.000000e+00 : f32
    %16 = vector.broadcast %cst_14 : f32 to vector<16x128xf32>
    %17 = arith.addf %16, %15 : vector<16x128xf32>
    %18 = arith.divf %16, %17 : vector<16x128xf32>
    %19 = vector.extract_strided_slice %12 {offsets = [0, 128], sizes = [16, 128], strides = [1, 1]} : vector<16x256xf32> to vector<16x128xf32>
    %20 = math.tanh %19 : vector<16x128xf32>
    %cst_15 = arith.constant 1.000000e+00 : f32
    %21 = vector.broadcast %cst_15 : f32 to vector<16x128xf32>
    %22 = arith.subf %21, %18 : vector<16x128xf32>
    %23 = arith.mulf %22, %20 : vector<16x128xf32>
    %cst_16 = arith.constant 0.000000e+00 : f32
    %24 = vector.broadcast %cst_16 : f32 to vector<16x128xf32>
    %25 = arith.maximumf %23, %24 : vector<16x128xf32>
    %26 = vector.extract_strided_slice %7 {offsets = [0, 0], sizes = [1, 128], strides = [1, 1]} : vector<2x128xf32> to vector<1x128xf32>
    %27 = vector.broadcast %26 : vector<1x128xf32> to vector<16x128xf32>
    %28 = arith.mulf %25, %27 : vector<16x128xf32>
    %cst_17 = arith.constant dense<0.000000e+00> : vector<16xf32>
    %29 = vector.multi_reduction <add>, %28, %cst_17 [1] : vector<16x128xf32> to vector<16xf32>
    %30 = vector.shape_cast %29 : vector<16xf32> to vector<16x1xf32>
    %31 = vector.extract_strided_slice %7 {offsets = [1, 0], sizes = [1, 1], strides = [1, 1]} : vector<2x128xf32> to vector<1x1xf32>
    %32 = vector.broadcast %31 : vector<1x1xf32> to vector<16x1xf32>
    %33 = arith.addf %30, %32 : vector<16x1xf32>
    %c0_18 = arith.constant 0 : index
    %c0_19 = arith.constant 0 : index
    %c0_20 = arith.constant 0 : index
    %34 = vector.load %arg5[%c0_18, %c0_19, %c0_20] : memref<1x16x1xf32, #tpu.memory_space<vmem>>, vector<1x16x1xf32>
    %35 = vector.shape_cast %34 : vector<1x16x1xf32> to vector<16x1xf32>
    %36 = vector.shape_cast %33 : vector<16x1xf32> to vector<1x16x1xf32>
    tpu.vector_store %arg5[%c0_18, %c0_19, %c0_20], %36 {strides = array<i32>} : memref<1x16x1xf32, #tpu.memory_space<vmem>>, vector<1x16x1xf32>,
    return
  }
  func.func @transform_0(%arg0: i32) -> (i32, i32, i32) {
    %c0_i32 = arith.constant 0 : i32
    %c0_i32_0 = arith.constant 0 : i32
    %c0_i32_1 = arith.constant 0 : i32
    return %arg0, %c0_i32, %c0_i32_0 : i32, i32, i32
  }
  func.func @transform_1(%arg0: i32) -> (i32, i32, i32) {
    %c0_i32 = arith.constant 0 : i32
    %c0_i32_0 = arith.constant 0 : i32
    %c0_i32_1 = arith.constant 0 : i32
    %c0_i32_2 = arith.constant 0 : i32
    return %c0_i32, %c0_i32_0, %c0_i32_1 : i32, i32, i32
  }
  func.func @transform_2(%arg0: i32) -> (i32, i32) {
    %c0_i32 = arith.constant 0 : i32
    %c0_i32_0 = arith.constant 0 : i32
    %c0_i32_1 = arith.constant 0 : i32
    return %c0_i32, %c0_i32_0 : i32, i32
  }
  func.func @transform_3(%arg0: i32) -> (i32, i32) {
    %c0_i32 = arith.constant 0 : i32
    %c0_i32_0 = arith.constant 0 : i32
    %c0_i32_1 = arith.constant 0 : i32
    return %c0_i32, %c0_i32_0 : i32, i32
  }
  func.func @transform_4(%arg0: i32) -> (i32, i32, i32) {
    %c0_i32 = arith.constant 0 : i32
    %c0_i32_0 = arith.constant 0 : i32
    %c0_i32_1 = arith.constant 0 : i32
    return %arg0, %c0_i32, %c0_i32_0 : i32, i32, i32
  }
}

</mosaic_0001>

<llo_original>
// kernel: tpu_custom_call.1
$region0: #{tpu_custom_call.1}
  #allocation0 [shape = 'u32[]', space=smem, size = 0x4, offset = 0x4, fixed_abs, tag = 'smem constant byte address 0x4 - core index']
  #allocation1 [shape = 'u32[144,128]{1,0:T(1,128)}', space=vmem, size = 0x12000, scoped, tag = 'internal scratch']
  %s0 = inlined_call_operand.vmem [shape: f32[1,16,4], index: 0, kind: input, shape index: {}]
  %s1 = inlined_call_operand.hbm [shape: f32[2,16,16], index: 1, kind: input, shape index: {}]
  %s2 = inlined_call_operand.hbm [shape: f32[16,256], index: 2, kind: input, shape index: {}]
  %s3 = inlined_call_operand.vmem [shape: f32[2,128], index: 3, kind: input, shape index: {}]
  %s4 = inlined_call_operand.vmem [shape: f32[1,16,1], index: 4, kind: output, shape index: {}]
  %s5 = sld [smem:[#allocation0]]
  $region34: #{tpu_custom_call.1} parent=0
    _
  %s7 = ssub.s32 1, %s5
  %s8 = scalar_select 0, %s7, %s5
  $region1: #{tpu_custom_call.1} parent=0
    #allocation2 [shape = 'u8[16384]{0}', space=vmem, size = 0x4000, scoped, tag = 'input window, operand 1, single buffered']
    #allocation3 [shape = 's32[1]{0}', space=sflag, size = 0x4, scoped, tag = 'scoped memory for tpu_custom_call.1']
    #allocation4 [shape = 'u8[16384]{0}', space=vmem, size = 0x4000, scoped, tag = 'input window, operand 2, single buffered']
    #allocation5 [shape = 's32[1]{0}', space=sflag, size = 0x4, scoped, tag = 'scoped memory for tpu_custom_call.1']
    %9 = vsyncpa [#allocation3], 0
    %10 = vsyncpa [#allocation5], 0
    // Predicated region
    $region2: #{tpu_custom_call.1} parent=1 // pred_check
      _
    $region3: #{tpu_custom_call.1} parent=1 // pred_check_branch
      %12 = sbr.rel (0) target = $region5
    $region4: #{tpu_custom_call.1} parent=1 // pred_region
      _
    $region5: #{tpu_custom_call.1} parent=1 // pred_fallthru
      _
    // Predicated region
    $region6: #{tpu_custom_call.1} parent=1 // pred_check
      _
    $region7: #{tpu_custom_call.1} parent=1 // pred_check_branch
      %14 = sbr.rel (0) target = $region9
    $region8: #{tpu_custom_call.1} parent=1 // pred_region
      %s16 = ssub.s32 512, 512
      %17 = vsyncadd [#allocation3], %s16
      %s18 = sshll.u32 [#allocation2], 4
      %s19 = int_to_ptr.vmem [resolvable:$true] %s18
      %24 = dma.hbm_to_vmem [thread:$0]  %s1, 512, %s19, [#allocation3], 128, 128, 8
    $region9: #{tpu_custom_call.1} parent=1 // pred_fallthru
      _
    // Predicated region
    $region10: #{tpu_custom_call.1} parent=1 // pred_check
      _
    $region11: #{tpu_custom_call.1} parent=1 // pred_check_branch
      %26 = sbr.rel (0) target = $region13
    $region12: #{tpu_custom_call.1} parent=1 // pred_region
      %s28 = ssub.s32 512, 512
      %29 = vsyncadd [#allocation5], %s28
      %s30 = sshll.u32 [#allocation4], 4
      %s31 = int_to_ptr.vmem [resolvable:$true] %s30
      %36 = dma.hbm_to_vmem [thread:$0]  %s2, 512, %s31, [#allocation5], 256, 256, 16
    $region13: #{tpu_custom_call.1} parent=1 // pred_fallthru
      _
    // Predicated region
    $region14: #{tpu_custom_call.1} parent=1 // pred_check
      _
    $region15: #{tpu_custom_call.1} parent=1 // pred_check_branch
      %38 = sbr.rel (0) target = $region17
    $region16: #{tpu_custom_call.1} parent=1 // pred_region
      _
    $region17: #{tpu_custom_call.1} parent=1 // pred_fallthru
      _
    // Predicated region
    $region18: #{tpu_custom_call.1} parent=1 // pred_check
      _
    $region19: #{tpu_custom_call.1} parent=1 // pred_check_branch
      %40 = sbr.rel (0) target = $region21
    $region20: #{tpu_custom_call.1} parent=1 // pred_region
      %41 = dma.done [#allocation3], 512
    $region21: #{tpu_custom_call.1} parent=1 // pred_fallthru
      _
    // Predicated region
    $region22: #{tpu_custom_call.1} parent=1 // pred_check
      _
    $region23: #{tpu_custom_call.1} parent=1 // pred_check_branch
      %43 = sbr.rel (0) target = $region25
    $region24: #{tpu_custom_call.1} parent=1 // pred_region
      %44 = dma.done [#allocation5], 512
    $region25: #{tpu_custom_call.1} parent=1 // pred_fallthru
      _
    %v45 = vld [vmem:[%s0] sm:$0xff]
    %v46 = vld [vmem:[%s0 + $0x8] sm:$0xff]
    %v47 = vld [vmem:[#allocation2] sm:$0xff]
    %v48 = vld [vmem:[#allocation2 + $0x8] sm:$0xff]
    %s49 = scalar_lea.vmem [#allocation2], 16
    %v50 = vld [vmem:[%s49] sm:$0xff]
    %v51 = vld [vmem:[%s49 + $0x8] sm:$0xff]
    %v52 = vld [vmem:[#allocation4] sm:$0xff]
    %v53 = vld [vmem:[#allocation4 + $0x8] sm:$0xff]
    %v54 = vld [vmem:[#allocation4 + $0x10] sm:$0xff]
    %v55 = vld [vmem:[#allocation4 + $0x18] sm:$0xff]
    %v56 = vld [vmem:[%s3] sm:$0x3]
    %vm57 = vcmask 130048
    %v59 = vsel %vm57, %v47, 0
    %v62 = vsel %vm57, %v48, 0
    %64 = vmatprep.subr.mxu0 0.0
    %65 = vmatpush1.msra.mxu0 0.0
    %66 = vmatprep.subr.mxu0 0.0
    %67 = vmatpush1.msra.mxu0 0.0
    %68 = vmatprep.subr.mxu0 0.0
    %69 = vmatpush1.msra.mxu0 0.0
    %70 = vmatprep.subr.mxu0 0.0
    %71 = vmatpush1.msra.mxu0 0.0
    %72 = vmatprep.subr.mxu0 0.0
    %73 = vmatpush1.msra.mxu0 0.0
    %74 = vmatprep.subr.mxu0 0.0
    %75 = vmatpush1.msra.mxu0 0.0
    %76 = vmatprep.subr.mxu0 0.0
    %77 = vmatpush1.msra.mxu0 0.0
    %78 = vmatprep.subr.mxu0 0.0
    %79 = vmatpush1.msra.mxu0 0.0
    %80 = vmatprep.subr.mxu0 0.0
    %81 = vmatpush1.msra.mxu0 0.0
    %82 = vmatprep.subr.mxu0 0.0
    %83 = vmatpush1.msra.mxu0 0.0
    %84 = vmatprep.subr.mxu0 0.0
    %85 = vmatpush1.msra.mxu0 0.0
    %86 = vmatprep.subr.mxu0 0.0
    %87 = vmatpush1.msra.mxu0 0.0
    %88 = vmatprep.subr.mxu0 0.0
    %89 = vmatpush1.msra.mxu0 0.0
    %90 = vmatprep.subr.mxu0 0.0
    %91 = vmatpush1.msra.mxu0 0.0
    %92 = vmatprep.subr.mxu0 0.0
    %93 = vmatpush1.msra.mxu0 %v46
    %94 = vmatprep.subr.mxu0 0.0
    %95 = vmatpush1.msra.mxu0 %v45
    %96 = vmatprep.subr.mxu0 0.0
    %97 = vmatpush2.msra.mxu0 0.0
    %98 = vmatprep.subr.mxu0 0.0
    %99 = vmatpush2.msra.mxu0 0.0
    %100 = vmatprep.subr.mxu0 0.0
    %101 = vmatpush2.msra.mxu0 0.0
    %102 = vmatprep.subr.mxu0 0.0
    %103 = vmatpush2.msra.mxu0 0.0
    %104 = vmatprep.subr.mxu0 0.0
    %105 = vmatpush2.msra.mxu0 0.0
    %106 = vmatprep.subr.mxu0 0.0
    %107 = vmatpush2.msra.mxu0 0.0
    %108 = vmatprep.subr.mxu0 0.0
    %109 = vmatpush2.msra.mxu0 0.0
    %110 = vmatprep.subr.mxu0 0.0
    %111 = vmatpush2.msra.mxu0 0.0
    %112 = vmatprep.subr.mxu0 0.0
    %113 = vmatpush2.msra.mxu0 0.0
    %114 = vmatprep.subr.mxu0 0.0
    %115 = vmatpush2.msra.mxu0 0.0
    %116 = vmatprep.subr.mxu0 0.0
    %117 = vmatpush2.msra.mxu0 0.0
    %118 = vmatprep.subr.mxu0 0.0
    %119 = vmatpush2.msra.mxu0 0.0
    %120 = vmatprep.subr.mxu0 0.0
    %121 = vmatpush2.msra.mxu0 0.0
    %122 = vmatprep.subr.mxu0 0.0
    %123 = vmatpush2.msra.mxu0 0.0
    %124 = vmatprep.subr.mxu0 0.0
    %125 = vmatpush2.msra.mxu0 0.0
    %126 = vmatprep.subr.mxu0 0.0
    %127 = vmatpush2.msra.mxu0 0.0
    %128 = vmatprep.mubr.f32.mxu0 0.0
    %129 = vmatmul.mubr.f32.gmra.mxu0 %v59
    %v130 = vpop.f32.mrf.mxu0
    %v131 = vadd.f32 0.0, %v130
    %v132 = vpop.f32.mrf.mxu0
    %133 = vmatprep.mubr.f32.mxu0 0.0
    %134 = vmatmul.mubr.f32.gmra.mxu0 %v62
    %v135 = vpop.f32.mrf.mxu0
    %v136 = vadd.f32 0.0, %v135
    %v137 = vpop.f32.mrf.mxu0
    %138 = vdwg.mxu0
    %v140 = vsel %vm57, %v50, 0
    %v143 = vsel %vm57, %v51, 0
    %145 = vmatprep.subr.mxu0 0.0
    %146 = vmatpush1.msra.mxu0 0.0
    %147 = vmatprep.subr.mxu0 0.0
    %148 = vmatpush1.msra.mxu0 0.0
    %149 = vmatprep.subr.mxu0 0.0
    %150 = vmatpush1.msra.mxu0 0.0
    %151 = vmatprep.subr.mxu0 0.0
    %152 = vmatpush1.msra.mxu0 0.0
    %153 = vmatprep.subr.mxu0 0.0
    %154 = vmatpush1.msra.mxu0 0.0
    %155 = vmatprep.subr.mxu0 0.0
    %156 = vmatpush1.msra.mxu0 0.0
    %157 = vmatprep.subr.mxu0 0.0
    %158 = vmatpush1.msra.mxu0 0.0
    %159 = vmatprep.subr.mxu0 0.0
    %160 = vmatpush1.msra.mxu0 0.0
    %161 = vmatprep.subr.mxu0 0.0
    %162 = vmatpush1.msra.mxu0 0.0
    %163 = vmatprep.subr.mxu0 0.0
    %164 = vmatpush1.msra.mxu0 0.0
    %165 = vmatprep.subr.mxu0 0.0
    %166 = vmatpush1.msra.mxu0 0.0
    %167 = vmatprep.subr.mxu0 0.0
    %168 = vmatpush1.msra.mxu0 0.0
    %169 = vmatprep.subr.mxu0 0.0
    %170 = vmatpush1.msra.mxu0 0.0
    %171 = vmatprep.subr.mxu0 0.0
    %172 = vmatpush1.msra.mxu0 0.0
    %173 = vmatprep.subr.mxu0 0.0
    %174 = vmatpush1.msra.mxu0 %v46
    %175 = vmatprep.subr.mxu0 0.0
    %176 = vmatpush1.msra.mxu0 %v45
    %177 = vmatprep.subr.mxu0 0.0
    %178 = vmatpush2.msra.mxu0 0.0
    %179 = vmatprep.subr.mxu0 0.0
    %180 = vmatpush2.msra.mxu0 0.0
    %181 = vmatprep.subr.mxu0 0.0
    %182 = vmatpush2.msra.mxu0 0.0
    %183 = vmatprep.subr.mxu0 0.0
    %184 = vmatpush2.msra.mxu0 0.0
    %185 = vmatprep.subr.mxu0 0.0
    %186 = vmatpush2.msra.mxu0 0.0
    %187 = vmatprep.subr.mxu0 0.0
    %188 = vmatpush2.msra.mxu0 0.0
    %189 = vmatprep.subr.mxu0 0.0
    %190 = vmatpush2.msra.mxu0 0.0
    %191 = vmatprep.subr.mxu0 0.0
    %192 = vmatpush2.msra.mxu0 0.0
    %193 = vmatprep.subr.mxu0 0.0
    %194 = vmatpush2.msra.mxu0 0.0
    %195 = vmatprep.subr.mxu0 0.0
    %196 = vmatpush2.msra.mxu0 0.0
    %197 = vmatprep.subr.mxu0 0.0
    %198 = vmatpush2.msra.mxu0 0.0
    %199 = vmatprep.subr.mxu0 0.0
    %200 = vmatpush2.msra.mxu0 0.0
    %201 = vmatprep.subr.mxu0 0.0
    %202 = vmatpush2.msra.mxu0 0.0
    %203 = vmatprep.subr.mxu0 0.0
    %204 = vmatpush2.msra.mxu0 0.0
    %205 = vmatprep.subr.mxu0 0.0
    %206 = vmatpush2.msra.mxu0 0.0
    %207 = vmatprep.subr.mxu0 0.0
    %208 = vmatpush2.msra.mxu0 0.0
    %209 = vmatprep.mubr.f32.mxu0 0.0
    %210 = vmatmul.mubr.f32.gmra.mxu0 %v140
    %v211 = vpop.f32.mrf.mxu0
    %v212 = vadd.f32 0.0, %v211
    %v213 = vpop.f32.mrf.mxu0
    %214 = vmatprep.mubr.f32.mxu0 0.0
    %215 = vmatmul.mubr.f32.gmra.mxu0 %v143
    %v216 = vpop.f32.mrf.mxu0
    %v217 = vadd.f32 0.0, %v216
    %v218 = vpop.f32.mrf.mxu0
    %219 = vdwg.mxu0
    %222 = vrot.lane.b32.xlu0 %v131, 4
    %v223 = vpop.permute.xlu0 %222
    %224 = vrot.lane.b32.xlu0 %v136, 4
    %v225 = vpop.permute.xlu0 %224
    %230 = vrot.lane.b32.xlu0 %v212, 8
    %v231 = vpop.permute.xlu0 %230
    %232 = vrot.lane.b32.xlu0 %v217, 8
    %v233 = vpop.permute.xlu0 %232
    %vm236 = vcmask 31744
    %v237 = vsel %vm236, %v45, %v223
    %v238 = vsel %vm236, %v46, %v225
    %vm239 = vcmask 64512
    %v240 = vsel %vm239, %v237, %v231
    %v241 = vsel %vm239, %v238, %v233
    %vm242 = vcmask 97280
    %v243 = vsel %vm242, %v240, 1.0
    %v244 = vsel %vm242, %v241, 1.0
    %v246 = vsel %vm57, %v243, 0
    %v249 = vsel %vm57, %v244, 0
    %251 = vmatprep.subr.mxu0 0.0
    %252 = vmatpush1.msra.mxu0 0.0
    %253 = vmatprep.subr.mxu0 0.0
    %254 = vmatpush1.msra.mxu0 0.0
    %255 = vmatprep.subr.mxu0 0.0
    %256 = vmatpush1.msra.mxu0 0.0
    %257 = vmatprep.subr.mxu0 0.0
    %258 = vmatpush1.msra.mxu0 0.0
    %259 = vmatprep.subr.mxu0 0.0
    %260 = vmatpush1.msra.mxu0 0.0
    %261 = vmatprep.subr.mxu0 0.0
    %262 = vmatpush1.msra.mxu0 0.0
    %263 = vmatprep.subr.mxu0 0.0
    %264 = vmatpush1.msra.mxu0 0.0
    %265 = vmatprep.subr.mxu0 0.0
    %266 = vmatpush1.msra.mxu0 0.0
    %267 = vmatprep.subr.mxu0 0.0
    %268 = vmatpush1.msra.mxu0 0.0
    %269 = vmatprep.subr.mxu0 0.0
    %270 = vmatpush1.msra.mxu0 0.0
    %271 = vmatprep.subr.mxu0 0.0
    %272 = vmatpush1.msra.mxu0 0.0
    %273 = vmatprep.subr.mxu0 0.0
    %274 = vmatpush1.msra.mxu0 0.0
    %275 = vmatprep.subr.mxu0 0.0
    %276 = vmatpush1.msra.mxu0 0.0
    %277 = vmatprep.subr.mxu0 0.0
    %278 = vmatpush1.msra.mxu0 0.0
    %279 = vmatprep.subr.mxu0 %v55
    %280 = vmatpush1.msra.mxu0 %v54
    %281 = vmatprep.subr.mxu0 %v53
    %282 = vmatpush1.msra.mxu0 %v52
    %283 = vmatprep.subr.mxu0 0.0
    %284 = vmatpush2.msra.mxu0 0.0
    %285 = vmatprep.subr.mxu0 0.0
    %286 = vmatpush2.msra.mxu0 0.0
    %287 = vmatprep.subr.mxu0 0.0
    %288 = vmatpush2.msra.mxu0 0.0
    %289 = vmatprep.subr.mxu0 0.0
    %290 = vmatpush2.msra.mxu0 0.0
    %291 = vmatprep.subr.mxu0 0.0
    %292 = vmatpush2.msra.mxu0 0.0
    %293 = vmatprep.subr.mxu0 0.0
    %294 = vmatpush2.msra.mxu0 0.0
    %295 = vmatprep.subr.mxu0 0.0
    %296 = vmatpush2.msra.mxu0 0.0
    %297 = vmatprep.subr.mxu0 0.0
    %298 = vmatpush2.msra.mxu0 0.0
    %299 = vmatprep.subr.mxu0 0.0
    %300 = vmatpush2.msra.mxu0 0.0
    %301 = vmatprep.subr.mxu0 0.0
    %302 = vmatpush2.msra.mxu0 0.0
    %303 = vmatprep.subr.mxu0 0.0
    %304 = vmatpush2.msra.mxu0 0.0
    %305 = vmatprep.subr.mxu0 0.0
    %306 = vmatpush2.msra.mxu0 0.0
    %307 = vmatprep.subr.mxu0 0.0
    %308 = vmatpush2.msra.mxu0 0.0
    %309 = vmatprep.subr.mxu0 0.0
    %310 = vmatpush2.msra.mxu0 0.0
    %311 = vmatprep.subr.mxu0 0.0
    %312 = vmatpush2.msra.mxu0 0.0
    %313 = vmatprep.subr.mxu0 0.0
    %314 = vmatpush2.msra.mxu0 0.0
    %315 = vmatprep.mubr.f32.mxu0 0.0
    %316 = vmatmul.mubr.f32.gmra.mxu0 %v246
    %v317 = vpop.f32.mrf.mxu0
    %v318 = vadd.f32 0.0, %v317
    %v319 = vpop.f32.mrf.mxu0
    %v320 = vadd.f32 0.0, %v319
    %321 = vmatprep.mubr.f32.mxu0 0.0
    %322 = vmatmul.mubr.f32.gmra.mxu0 %v249
    %v323 = vpop.f32.mrf.mxu0
    %v324 = vadd.f32 0.0, %v323
    %v325 = vpop.f32.mrf.mxu0
    %v326 = vadd.f32 0.0, %v325
    %327 = vdwg.mxu0
    %v328 = vxor.u32 %v318, 2147483648
    %v329 = vxor.u32 %v324, 2147483648
    %v330 = vmul.f32 %v328, 1.442695
    %v331 = vpow.pop %v330
    %v332 = vmul.f32 %v329, 1.442695
    %v333 = vpow.pop %v332
    %v334 = vadd.f32 %v331, 1.0
    %v335 = vadd.f32 %v333, 1.0
    %v336 = vrcp.pop %v334
    %v337 = vmul.f32 1.0, %v336
    %v338 = vrcp.pop %v335
    %v339 = vmul.f32 1.0, %v338
    %v340 = vtanh.pop %v320
    %v341 = vtanh.pop %v326
    %v342 = vsub.f32 1.0, %v337
    %v343 = vsub.f32 1.0, %v339
    %v344 = vmul.f32 %v342, %v340
    %v345 = vmul.f32 %v343, %v341
    %v346 = vmax.f32 %v344, 0.0
    %v347 = vmax.f32 %v345, 0.0
    %v348 = vlaneseq
    %v349 = vshrl.u32 %v348, 7
    %v350 = vsub.s32 0, %v349
    %v351 = vrot.slane %v56, %v350
    %v352 = vmul.f32 %v346, %v351
    %v353 = vmul.f32 %v347, %v351
    %354 = vadd.xlane.f32.xlu0 %v352
    %v355 = vpop.xlane.xlu0 %354
    %356 = vadd.xlane.f32.xlu0 %v353
    %v357 = vpop.xlane.xlu0 %356
    %v358 = vlaneseq
    %v359 = vshrl.u32 %v358, 7
    %v360 = vsub.s32 1, %v359
    %v361 = vrot.slane %v56, %v360
    %v362 = vadd.f32 %v355, %v361
    %v363 = vadd.f32 %v357, %v361
    %vm364 = vcmask 7168
    %365 = vst.msk [vmem:[%s4] sm:$0xff] %vm364, %v362
    %366 = vst.msk [vmem:[%s4 + $0x8] sm:$0xff] %vm364, %v363
    // Predicated region
    $region26: #{tpu_custom_call.1} parent=1 // pred_check
      _
    $region27: #{tpu_custom_call.1} parent=1 // pred_check_branch
      %368 = sbr.rel (0) target = $region29
    $region28: #{tpu_custom_call.1} parent=1 // pred_region
      _
    $region29: #{tpu_custom_call.1} parent=1 // pred_fallthru
      _
    // Predicated region
    $region30: #{tpu_custom_call.1} parent=1 // pred_check
      _
    $region31: #{tpu_custom_call.1} parent=1 // pred_check_branch
      %370 = sbr.rel (0) target = $region33
    $region32: #{tpu_custom_call.1} parent=1 // pred_region
      _
    $region33: #{tpu_custom_call.1} parent=1 // pred_fallthru
      _
    %371 = vsyncpa [#allocation3], 1
    %372 = vsyncpa [#allocation5], 1

</llo_original>
